<compile_context>
chip_gen: v5e
topology: v5e:2x2
jax: 0.10.0
libtpu: 0.0.40
codegen_flags: <defaults>
</compile_context>

<pallas_src>
import numpy as np
import jax
import jax.numpy as jnp
from jax.experimental import pallas as pl
from jax.experimental.pallas import tpu as pltpu

NUM_OUT = 10
NUM_IN = 2
LANE = 128
# 1024 rows x 128 lanes x (2 in + 10 out) ch x 4 B = 6 MiB HBM traffic / step,
# ~12 MiB double-buffered VMEM -> fits the default scoped VMEM on v5e/v6e/v7x.
DEFAULT_TILE_ROWS = 1024


# ----------------------------------------------------------------------------
# Deterministic weight construction (mirrors get_orientation_bin_weights).
# ----------------------------------------------------------------------------
def make_orientation_bin_weights() -> np.ndarray:
    """Returns the (10, 2) weight matrix of the 1x1 convolution (numpy, f32)."""
    theta_edges = np.linspace(0.0, 2.0 * np.pi, num=9, dtype=np.float64)[:-1]
    theta_edges = theta_edges + np.pi / 8.0
    dx = np.cos(theta_edges)
    dy = np.sin(theta_edges)
    edge_vectors = np.stack([dx, dy], axis=1)            # (8, 2)
    eye_2d = np.eye(2)                                    # (2, 2)
    weight_mat = np.concatenate([edge_vectors, eye_2d], axis=0)  # (10, 2)
    return weight_mat.astype(np.float32)


# ----------------------------------------------------------------------------
# Pallas kernel (weights baked in as immediates; identical for all layouts).
# ----------------------------------------------------------------------------
def _make_kernel(weights_np: np.ndarray):
    # Compile-time Python constants -> no SMEM loads / scalar broadcasts per step.
    w = [(float(weights_np[o, 0]), float(weights_np[o, 1])) for o in range(NUM_OUT)]

    def kernel(x_ref, o_ref):
        # x_ref: (2, TR, TL)  VMEM;  o_ref: (10, TR, TL) VMEM.
        x0 = x_ref[0]
        x1 = x_ref[1]
        for o in range(NUM_OUT):
            o_ref[o] = w[o][0] * x0 + w[o][1] * x1

    return kernel


def _round_up(v: int, m: int) -> int:
    return -(-v // m) * m


def _pick_row_tile(rows: int, tile_rows: int) -> int:
    """Row tile: multiple of 8, and >=2 grid steps for non-tiny problems so the
    'parallel' grid axis shards across both TensorCores on v7x."""
    if rows <= 16:
        return rows                        # single block == full dim (always legal)
    half = _round_up(pl.cdiv(rows, 2), 8)  # guarantees cdiv(rows, tr) >= 2
    return min(tile_rows, half)


def _cost(p: int) -> pl.CostEstimate:
    # 10 outputs x (2 mul + 1 add) per pixel; 8 B in + 40 B out per pixel.
    return pl.CostEstimate(
        flops=30 * p,
        transcendentals=0,
        bytes_accessed=(NUM_IN + NUM_OUT) * 4 * p,
    )


# ----------------------------------------------------------------------------
# Wrapper: layout plumbing only (no extra HBM passes on the common paths).
# ----------------------------------------------------------------------------
def sift_orientation_layer(
    x: jnp.ndarray,
    weights_np: np.ndarray | None = None,
    tile_rows: int = DEFAULT_TILE_ROWS,
) -> jnp.ndarray:
    """Applies the SIFT orientation 1x1 conv. x: (1, 2, H, W) -> (1, 10, H, W) f32."""
    if weights_np is None:
        weights_np = make_orientation_bin_weights()

    n, c, h, w = x.shape
    assert n == 1 and c == NUM_IN
    if x.dtype != jnp.float32:
        # Conv weights are f32; keep the whole compute in f32 (matches PyTorch).
        x = x.astype(jnp.float32)

    kernel = _make_kernel(weights_np)
    tile_rows = max(8, (tile_rows // 8) * 8)
    p = h * w

    # --- Path 1: zero-copy lane-dense flatten (p is a multiple of 128) ---------
    if p % LANE == 0:
        rows = p // LANE
        tr = _pick_row_tile(rows, tile_rows)
        x_tiles = x.reshape(NUM_IN, rows, LANE)          # contiguous reshape: free
        out = pl.pallas_call(
            kernel,
            out_shape=jax.ShapeDtypeStruct((NUM_OUT, rows, LANE), jnp.float32),
            grid_spec=pl.GridSpec(
                grid=(pl.cdiv(rows, tr),),
                in_specs=[pl.BlockSpec((NUM_IN, tr, LANE), lambda i: (0, i, 0))],
                out_specs=pl.BlockSpec((NUM_OUT, tr, LANE), lambda i: (0, i, 0)),
            ),
            compiler_params=pltpu.CompilerParams(
                dimension_semantics=("parallel",)),
            cost_estimate=_cost(p),
        )(x_tiles)
        return out.reshape(1, NUM_OUT, h, w)

    # --- Path 2: ragged p but W >= 128 -> direct (C, H, W) 2-D grid ------------
    # No pad / un-pad copies; ragged H / W block edges use Pallas partial-block
    # masking.  OOB input reads are garbage but safe: the op is elementwise and
    # the corresponding output rows/lanes are masked on store.
    if w >= LANE:
        th = h if h <= tile_rows else tile_rows          # full dim or multiple of 8
        x3 = x.reshape(NUM_IN, h, w)
        out = pl.pallas_call(
            kernel,
            out_shape=jax.ShapeDtypeStruct((NUM_OUT, h, w), jnp.float32),
            grid_spec=pl.GridSpec(
                grid=(pl.cdiv(h, th), pl.cdiv(w, LANE)),
                in_specs=[pl.BlockSpec((NUM_IN, th, LANE), lambda i, j: (0, i, j))],
                out_specs=pl.BlockSpec((NUM_OUT, th, LANE), lambda i, j: (0, i, j)),
            ),
            compiler_params=pltpu.CompilerParams(
                dimension_semantics=("parallel", "parallel")),
            cost_estimate=_cost(p),
        )(x3)
        return out.reshape(1, NUM_OUT, h, w)

    # --- Path 3: small-image fallback (W < 128 and ragged p) -------------------
    rows = pl.cdiv(p, LANE)
    tr = _pick_row_tile(rows, tile_rows)
    padded_p = rows * LANE
    x_flat = jnp.pad(x.reshape(NUM_IN, p), ((0, 0), (0, padded_p - p)))
    x_tiles = x_flat.reshape(NUM_IN, rows, LANE)
    out = pl.pallas_call(
        kernel,
        out_shape=jax.ShapeDtypeStruct((NUM_OUT, rows, LANE), jnp.float32),
        grid_spec=pl.GridSpec(
            grid=(pl.cdiv(rows, tr),),
            in_specs=[pl.BlockSpec((NUM_IN, tr, LANE), lambda i: (0, i, 0))],
            out_specs=pl.BlockSpec((NUM_OUT, tr, LANE), lambda i: (0, i, 0)),
        ),
        compiler_params=pltpu.CompilerParams(dimension_semantics=("parallel",)),
        cost_estimate=_cost(padded_p),
    )(x_tiles)
    out_flat = out.reshape(NUM_OUT, padded_p)[:, :p]
    return out_flat.reshape(1, NUM_OUT, h, w)


# ----------------------------------------------------------------------------
# Main: small deterministic tests vs. a pure-JAX reference.
# ----------------------------------------------------------------------------
if __name__ == "__main__":
    key = jax.random.PRNGKey(0)
    weights_np = make_orientation_bin_weights()          # (10, 2)
    weights_j = jnp.asarray(weights_np)

    def ref_fn(x):
        return jnp.einsum("oc,nchw->nohw", weights_j, x)

    # (H, W, tile_rows): exercise all three layout paths, partial blocks, and
    # multi-step ("parallel") grids.
    cases = [
        (16, 16, DEFAULT_TILE_ROWS),   # p%128==0, rows=2  -> path 1, single block
        (64, 128, DEFAULT_TILE_ROWS),  # p%128==0, rows=64 -> path 1, grid=(2,)
        (32, 128, 8),                  # p%128==0, rows=32 -> path 1, grid=(4,)
        (12, 200, DEFAULT_TILE_ROWS),  # ragged p, W>128   -> path 2, grid=(1,2)
        (43, 200, 8),                  # ragged p, W>128   -> path 2, partial H+W edges
        (10, 13, DEFAULT_TILE_ROWS),   # ragged p, W<128   -> path 3 (pad fallback)
    ]

    for H, W, tr in cases:
        key, sub = jax.random.split(key)
        x = jax.random.normal(sub, (1, NUM_IN, H, W), dtype=jnp.float32)

        out = sift_orientation_layer(x, weights_np, tile_rows=tr)
        out = jax.block_until_ready(out)

        ref = ref_fn(x)
        assert out.shape == (1, NUM_OUT, H, W), out.shape
        assert out.dtype == jnp.float32
        np.testing.assert_allclose(np.asarray(out), np.asarray(ref), rtol=1e-5, atol=1e-5)

    print("KERNEL_OK")
</pallas_src>

<mosaic_0001>
module attributes {stable_mosaic.version = 11 : i64} {
  func.func @kernel(%arg0: i32, %arg1: memref<2x2x128xf32, #tpu.memory_space<vmem>>, %arg2: memref<10x2x128xf32, #tpu.memory_space<vmem>>) attributes {dimension_semantics = [#tpu.dimension_semantics<parallel>], iteration_bounds = array<i64: 1>, scalar_prefetch = 0 : i64, scratch_operands = 0 : i64, tpu.core_type = #tpu.core_type<tc>, window_params = [{transform_indices = @transform_0, window_bounds = array<i64: 2, 2, 128>}, {transform_indices = @transform_1, window_bounds = array<i64: 10, 2, 128>}]} {
    %c0 = arith.constant 0 : index
    %c0_0 = arith.constant 0 : index
    %c0_1 = arith.constant 0 : index
    %0 = vector.load %arg1[%c0, %c0_0, %c0_1] : memref<2x2x128xf32, #tpu.memory_space<vmem>>, vector<1x2x128xf32>
    %1 = vector.shape_cast %0 : vector<1x2x128xf32> to vector<2x128xf32>
    %c1 = arith.constant 1 : index
    %c0_2 = arith.constant 0 : index
    %c0_3 = arith.constant 0 : index
    %2 = vector.load %arg1[%c1, %c0_2, %c0_3] : memref<2x2x128xf32, #tpu.memory_space<vmem>>, vector<1x2x128xf32>
    %3 = vector.shape_cast %2 : vector<1x2x128xf32> to vector<2x128xf32>
    %cst = arith.constant 0.923879504 : f32
    %4 = vector.broadcast %cst : f32 to vector<2x128xf32>
    %5 = arith.mulf %4, %1 : vector<2x128xf32>
    %cst_4 = arith.constant 0.382683426 : f32
    %6 = vector.broadcast %cst_4 : f32 to vector<2x128xf32>
    %7 = arith.mulf %6, %3 : vector<2x128xf32>
    %8 = arith.addf %5, %7 : vector<2x128xf32>
    %c0_5 = arith.constant 0 : index
    %c0_6 = arith.constant 0 : index
    %c0_7 = arith.constant 0 : index
    %9 = vector.load %arg2[%c0_5, %c0_6, %c0_7] : memref<10x2x128xf32, #tpu.memory_space<vmem>>, vector<1x2x128xf32>
    %10 = vector.shape_cast %9 : vector<1x2x128xf32> to vector<2x128xf32>
    %11 = vector.shape_cast %8 : vector<2x128xf32> to vector<1x2x128xf32>
    tpu.vector_store %arg2[%c0_5, %c0_6, %c0_7], %11 {strides = array<i32>} : memref<10x2x128xf32, #tpu.memory_space<vmem>>, vector<1x2x128xf32>,
    %cst_8 = arith.constant 0.382683426 : f32
    %12 = vector.broadcast %cst_8 : f32 to vector<2x128xf32>
    %13 = arith.mulf %12, %1 : vector<2x128xf32>
    %cst_9 = arith.constant 0.923879504 : f32
    %14 = vector.broadcast %cst_9 : f32 to vector<2x128xf32>
    %15 = arith.mulf %14, %3 : vector<2x128xf32>
    %16 = arith.addf %13, %15 : vector<2x128xf32>
    %c1_10 = arith.constant 1 : index
    %c0_11 = arith.constant 0 : index
    %c0_12 = arith.constant 0 : index
    %17 = vector.load %arg2[%c1_10, %c0_11, %c0_12] : memref<10x2x128xf32, #tpu.memory_space<vmem>>, vector<1x2x128xf32>
    %18 = vector.shape_cast %17 : vector<1x2x128xf32> to vector<2x128xf32>
    %19 = vector.shape_cast %16 : vector<2x128xf32> to vector<1x2x128xf32>
    tpu.vector_store %arg2[%c1_10, %c0_11, %c0_12], %19 {strides = array<i32>} : memref<10x2x128xf32, #tpu.memory_space<vmem>>, vector<1x2x128xf32>,
    %cst_13 = arith.constant -0.382683426 : f32
    %20 = vector.broadcast %cst_13 : f32 to vector<2x128xf32>
    %21 = arith.mulf %20, %1 : vector<2x128xf32>
    %cst_14 = arith.constant 0.923879504 : f32
    %22 = vector.broadcast %cst_14 : f32 to vector<2x128xf32>
    %23 = arith.mulf %22, %3 : vector<2x128xf32>
    %24 = arith.addf %21, %23 : vector<2x128xf32>
    %c2 = arith.constant 2 : index
    %c0_15 = arith.constant 0 : index
    %c0_16 = arith.constant 0 : index
    %25 = vector.load %arg2[%c2, %c0_15, %c0_16] : memref<10x2x128xf32, #tpu.memory_space<vmem>>, vector<1x2x128xf32>
    %26 = vector.shape_cast %25 : vector<1x2x128xf32> to vector<2x128xf32>
    %27 = vector.shape_cast %24 : vector<2x128xf32> to vector<1x2x128xf32>
    tpu.vector_store %arg2[%c2, %c0_15, %c0_16], %27 {strides = array<i32>} : memref<10x2x128xf32, #tpu.memory_space<vmem>>, vector<1x2x128xf32>,
    %cst_17 = arith.constant -0.923879504 : f32
    %28 = vector.broadcast %cst_17 : f32 to vector<2x128xf32>
    %29 = arith.mulf %28, %1 : vector<2x128xf32>
    %cst_18 = arith.constant 0.382683426 : f32
    %30 = vector.broadcast %cst_18 : f32 to vector<2x128xf32>
    %31 = arith.mulf %30, %3 : vector<2x128xf32>
    %32 = arith.addf %29, %31 : vector<2x128xf32>
    %c3 = arith.constant 3 : index
    %c0_19 = arith.constant 0 : index
    %c0_20 = arith.constant 0 : index
    %33 = vector.load %arg2[%c3, %c0_19, %c0_20] : memref<10x2x128xf32, #tpu.memory_space<vmem>>, vector<1x2x128xf32>
    %34 = vector.shape_cast %33 : vector<1x2x128xf32> to vector<2x128xf32>
    %35 = vector.shape_cast %32 : vector<2x128xf32> to vector<1x2x128xf32>
    tpu.vector_store %arg2[%c3, %c0_19, %c0_20], %35 {strides = array<i32>} : memref<10x2x128xf32, #tpu.memory_space<vmem>>, vector<1x2x128xf32>,
    %cst_21 = arith.constant -0.923879504 : f32
    %36 = vector.broadcast %cst_21 : f32 to vector<2x128xf32>
    %37 = arith.mulf %36, %1 : vector<2x128xf32>
    %cst_22 = arith.constant -0.382683426 : f32
    %38 = vector.broadcast %cst_22 : f32 to vector<2x128xf32>
    %39 = arith.mulf %38, %3 : vector<2x128xf32>
    %40 = arith.addf %37, %39 : vector<2x128xf32>
    %c4 = arith.constant 4 : index
    %c0_23 = arith.constant 0 : index
    %c0_24 = arith.constant 0 : index
    %41 = vector.load %arg2[%c4, %c0_23, %c0_24] : memref<10x2x128xf32, #tpu.memory_space<vmem>>, vector<1x2x128xf32>
    %42 = vector.shape_cast %41 : vector<1x2x128xf32> to vector<2x128xf32>
    %43 = vector.shape_cast %40 : vector<2x128xf32> to vector<1x2x128xf32>
    tpu.vector_store %arg2[%c4, %c0_23, %c0_24], %43 {strides = array<i32>} : memref<10x2x128xf32, #tpu.memory_space<vmem>>, vector<1x2x128xf32>,
    %cst_25 = arith.constant -0.382683426 : f32
    %44 = vector.broadcast %cst_25 : f32 to vector<2x128xf32>
    %45 = arith.mulf %44, %1 : vector<2x128xf32>
    %cst_26 = arith.constant -0.923879504 : f32
    %46 = vector.broadcast %cst_26 : f32 to vector<2x128xf32>
    %47 = arith.mulf %46, %3 : vector<2x128xf32>
    %48 = arith.addf %45, %47 : vector<2x128xf32>
    %c5 = arith.constant 5 : index
    %c0_27 = arith.constant 0 : index
    %c0_28 = arith.constant 0 : index
    %49 = vector.load %arg2[%c5, %c0_27, %c0_28] : memref<10x2x128xf32, #tpu.memory_space<vmem>>, vector<1x2x128xf32>
    %50 = vector.shape_cast %49 : vector<1x2x128xf32> to vector<2x128xf32>
    %51 = vector.shape_cast %48 : vector<2x128xf32> to vector<1x2x128xf32>
    tpu.vector_store %arg2[%c5, %c0_27, %c0_28], %51 {strides = array<i32>} : memref<10x2x128xf32, #tpu.memory_space<vmem>>, vector<1x2x128xf32>,
    %cst_29 = arith.constant 0.382683426 : f32
    %52 = vector.broadcast %cst_29 : f32 to vector<2x128xf32>
    %53 = arith.mulf %52, %1 : vector<2x128xf32>
    %cst_30 = arith.constant -0.923879504 : f32
    %54 = vector.broadcast %cst_30 : f32 to vector<2x128xf32>
    %55 = arith.mulf %54, %3 : vector<2x128xf32>
    %56 = arith.addf %53, %55 : vector<2x128xf32>
    %c6 = arith.constant 6 : index
    %c0_31 = arith.constant 0 : index
    %c0_32 = arith.constant 0 : index
    %57 = vector.load %arg2[%c6, %c0_31, %c0_32] : memref<10x2x128xf32, #tpu.memory_space<vmem>>, vector<1x2x128xf32>
    %58 = vector.shape_cast %57 : vector<1x2x128xf32> to vector<2x128xf32>
    %59 = vector.shape_cast %56 : vector<2x128xf32> to vector<1x2x128xf32>
    tpu.vector_store %arg2[%c6, %c0_31, %c0_32], %59 {strides = array<i32>} : memref<10x2x128xf32, #tpu.memory_space<vmem>>, vector<1x2x128xf32>,
    %cst_33 = arith.constant 0.923879504 : f32
    %60 = vector.broadcast %cst_33 : f32 to vector<2x128xf32>
    %61 = arith.mulf %60, %1 : vector<2x128xf32>
    %cst_34 = arith.constant -0.382683426 : f32
    %62 = vector.broadcast %cst_34 : f32 to vector<2x128xf32>
    %63 = arith.mulf %62, %3 : vector<2x128xf32>
    %64 = arith.addf %61, %63 : vector<2x128xf32>
    %c7 = arith.constant 7 : index
    %c0_35 = arith.constant 0 : index
    %c0_36 = arith.constant 0 : index
    %65 = vector.load %arg2[%c7, %c0_35, %c0_36] : memref<10x2x128xf32, #tpu.memory_space<vmem>>, vector<1x2x128xf32>
    %66 = vector.shape_cast %65 : vector<1x2x128xf32> to vector<2x128xf32>
    %67 = vector.shape_cast %64 : vector<2x128xf32> to vector<1x2x128xf32>
    tpu.vector_store %arg2[%c7, %c0_35, %c0_36], %67 {strides = array<i32>} : memref<10x2x128xf32, #tpu.memory_space<vmem>>, vector<1x2x128xf32>,
    %cst_37 = arith.constant 1.000000e+00 : f32
    %68 = vector.broadcast %cst_37 : f32 to vector<2x128xf32>
    %69 = arith.mulf %68, %1 : vector<2x128xf32>
    %cst_38 = arith.constant 0.000000e+00 : f32
    %70 = vector.broadcast %cst_38 : f32 to vector<2x128xf32>
    %71 = arith.mulf %70, %3 : vector<2x128xf32>
    %72 = arith.addf %69, %71 : vector<2x128xf32>
    %c8 = arith.constant 8 : index
    %c0_39 = arith.constant 0 : index
    %c0_40 = arith.constant 0 : index
    %73 = vector.load %arg2[%c8, %c0_39, %c0_40] : memref<10x2x128xf32, #tpu.memory_space<vmem>>, vector<1x2x128xf32>
    %74 = vector.shape_cast %73 : vector<1x2x128xf32> to vector<2x128xf32>
    %75 = vector.shape_cast %72 : vector<2x128xf32> to vector<1x2x128xf32>
    tpu.vector_store %arg2[%c8, %c0_39, %c0_40], %75 {strides = array<i32>} : memref<10x2x128xf32, #tpu.memory_space<vmem>>, vector<1x2x128xf32>,
    %cst_41 = arith.constant 0.000000e+00 : f32
    %76 = vector.broadcast %cst_41 : f32 to vector<2x128xf32>
    %77 = arith.mulf %76, %1 : vector<2x128xf32>
    %cst_42 = arith.constant 1.000000e+00 : f32
    %78 = vector.broadcast %cst_42 : f32 to vector<2x128xf32>
    %79 = arith.mulf %78, %3 : vector<2x128xf32>
    %80 = arith.addf %77, %79 : vector<2x128xf32>
    %c9 = arith.constant 9 : index
    %c0_43 = arith.constant 0 : index
    %c0_44 = arith.constant 0 : index
    %81 = vector.load %arg2[%c9, %c0_43, %c0_44] : memref<10x2x128xf32, #tpu.memory_space<vmem>>, vector<1x2x128xf32>
    %82 = vector.shape_cast %81 : vector<1x2x128xf32> to vector<2x128xf32>
    %83 = vector.shape_cast %80 : vector<2x128xf32> to vector<1x2x128xf32>
    tpu.vector_store %arg2[%c9, %c0_43, %c0_44], %83 {strides = array<i32>} : memref<10x2x128xf32, #tpu.memory_space<vmem>>, vector<1x2x128xf32>,
    return
  }
  func.func @transform_0(%arg0: i32) -> (i32, i32, i32) {
    %c0_i32 = arith.constant 0 : i32
    %c0_i32_0 = arith.constant 0 : i32
    %c0_i32_1 = arith.constant 0 : i32
    return %c0_i32, %arg0, %c0_i32_0 : i32, i32, i32
  }
  func.func @transform_1(%arg0: i32) -> (i32, i32, i32) {
    %c0_i32 = arith.constant 0 : i32
    %c0_i32_0 = arith.constant 0 : i32
    %c0_i32_1 = arith.constant 0 : i32
    return %c0_i32, %arg0, %c0_i32_0 : i32, i32, i32
  }
}

</mosaic_0001>

<llo_original>
// kernel: tpu_custom_call.1
$region0: #{tpu_custom_call.1}
  #allocation0 [shape = 'u32[]', space=smem, size = 0x4, offset = 0x4, fixed_abs, tag = 'smem constant byte address 0x4 - core index']
  #allocation1 [shape = 'u32[72,128]{1,0:T(1,128)}', space=vmem, size = 0x9000, scoped, tag = 'internal scratch']
  %s0 = inlined_call_operand.hbm [shape: f32[2,2,128], index: 0, kind: input, shape index: {}]
  %s1 = inlined_call_operand.hbm [shape: f32[10,2,128], index: 1, kind: output, shape index: {}]
  %s2 = sld [smem:[#allocation0]]
  $region18: #{tpu_custom_call.1} parent=0
    _
  %s4 = ssub.s32 1, %s2
  %s5 = scalar_select 0, %s4, %s2
  $region1: #{tpu_custom_call.1} parent=0
    #allocation2 [shape = 'u8[2048]{0}', space=vmem, size = 0x800, scoped, tag = 'input window, operand 0, single buffered']
    #allocation3 [shape = 's32[1]{0}', space=sflag, size = 0x4, scoped, tag = 'scoped memory for tpu_custom_call.1']
    #allocation4 [shape = 's32[1]{0}', space=sflag, size = 0x4, scoped, tag = 'scoped memory for tpu_custom_call.1']
    #allocation5 [shape = 'u8[10240]{0}', space=vmem, size = 0x2800, scoped, tag = 'output window, operand 0, single buffered']
    %6 = vsyncpa [#allocation3], 0
    %7 = vsyncpa [#allocation4], 0
    // Predicated region
    $region2: #{tpu_custom_call.1} parent=1 // pred_check
      _
    $region3: #{tpu_custom_call.1} parent=1 // pred_check_branch
      %9 = sbr.rel (0) target = $region5
    $region4: #{tpu_custom_call.1} parent=1 // pred_region
      %11 = vsyncadd [#allocation3], 0
      %s12 = sshll.u32 %s0, 4
      %s13 = int_to_ptr.hbm [resolvable:$true] %s12
      %s14 = sshll.u32 [#allocation2], 4
      %s15 = int_to_ptr.vmem [resolvable:$true] %s14
      %20 = dma.hbm_to_vmem [thread:$0]  %s13, 64, %s15, [#allocation3], 32, 32, 2
    $region5: #{tpu_custom_call.1} parent=1 // pred_fallthru
      _
    // Predicated region
    $region6: #{tpu_custom_call.1} parent=1 // pred_check
      _
    $region7: #{tpu_custom_call.1} parent=1 // pred_check_branch
      %22 = sbr.rel (0) target = $region9
    $region8: #{tpu_custom_call.1} parent=1 // pred_region
      %24 = dma.done [#allocation3], 64
    $region9: #{tpu_custom_call.1} parent=1 // pred_fallthru
      _
    %v25 = vld [vmem:[#allocation2] sm:$0x3]
    %s26 = scalar_lea.vmem [#allocation2], 2
    %v27 = vld [vmem:[%s26] sm:$0x3]
    %v28 = vmul.f32 %v25, 0.9238795
    %v29 = vmul.f32 %v27, 0.38268343
    %v30 = vadd.f32 %v28, %v29
    %31 = vst [vmem:[#allocation5] sm:$0x3] %v30
    %v32 = vmul.f32 %v25, 0.38268343
    %v33 = vmul.f32 %v27, 0.9238795
    %v34 = vadd.f32 %v32, %v33
    %s35 = scalar_lea.vmem [#allocation5], 2
    %36 = vst [vmem:[%s35] sm:$0x3] %v34
    %v37 = vmul.f32 %v25, -0.38268343
    %v38 = vadd.f32 %v37, %v33
    %s39 = scalar_lea.vmem [#allocation5], 4
    %40 = vst [vmem:[%s39] sm:$0x3] %v38
    %v41 = vmul.f32 %v25, -0.9238795
    %v42 = vadd.f32 %v41, %v29
    %s43 = scalar_lea.vmem [#allocation5], 6
    %44 = vst [vmem:[%s43] sm:$0x3] %v42
    %v45 = vmul.f32 %v27, -0.38268343
    %v46 = vadd.f32 %v41, %v45
    %s47 = scalar_lea.vmem [#allocation5], 8
    %48 = vst [vmem:[%s47] sm:$0x3] %v46
    %v49 = vmul.f32 %v27, -0.9238795
    %v50 = vadd.f32 %v37, %v49
    %s51 = scalar_lea.vmem [#allocation5], 10
    %52 = vst [vmem:[%s51] sm:$0x3] %v50
    %v53 = vadd.f32 %v32, %v49
    %s54 = scalar_lea.vmem [#allocation5], 12
    %55 = vst [vmem:[%s54] sm:$0x3] %v53
    %v56 = vadd.f32 %v28, %v45
    %s57 = scalar_lea.vmem [#allocation5], 14
    %58 = vst [vmem:[%s57] sm:$0x3] %v56
    %v59 = vmul.f32 %v27, 0.0
    %v60 = vadd.f32 %v25, %v59
    %s61 = scalar_lea.vmem [#allocation5], 16
    %62 = vst [vmem:[%s61] sm:$0x3] %v60
    %v63 = vmul.f32 %v25, 0.0
    %v64 = vadd.f32 %v63, %v27
    %s65 = scalar_lea.vmem [#allocation5], 18
    %66 = vst [vmem:[%s65] sm:$0x3] %v64
    // Predicated region
    $region10: #{tpu_custom_call.1} parent=1 // pred_check
      _
    $region11: #{tpu_custom_call.1} parent=1 // pred_check_branch
      %68 = sbr.rel (0) target = $region13
    $region12: #{tpu_custom_call.1} parent=1 // pred_region
      %70 = vsyncadd [#allocation4], 0
      %s71 = sshll.u32 [#allocation5], 4
      %s72 = int_to_ptr.vmem [resolvable:$true] %s71
      %s73 = sshll.u32 %s1, 4
      %s74 = int_to_ptr.hbm [resolvable:$true] %s73
      %79 = dma.vmem_to_hbm [thread:$0]  %s72, 320, %s74, [#allocation4], 32, 32, 2
    $region13: #{tpu_custom_call.1} parent=1 // pred_fallthru
      _
    // Predicated region
    $region14: #{tpu_custom_call.1} parent=1 // pred_check
      _
    $region15: #{tpu_custom_call.1} parent=1 // pred_check_branch
      %81 = sbr.rel (0) target = $region17
    $region16: #{tpu_custom_call.1} parent=1 // pred_region
      %83 = dma.done [#allocation4], 320
    $region17: #{tpu_custom_call.1} parent=1 // pred_fallthru
      _
    %84 = vsyncpa [#allocation3], 1
    %85 = vsyncpa [#allocation4], 1

</llo_original>
